<compile_context>
chip_gen: v7x
topology: tpu7x:2x2x1
jax: 0.10.0
libtpu: 0.0.40
codegen_flags: <defaults>
</compile_context>

<pallas_src>
import jax
import jax.numpy as jnp
import numpy as np
from jax.experimental import pallas as pl
from jax.experimental.pallas import tpu as pltpu

NUM_GROUPS = 32
EPS = 1e-5


# ----------------------------------------------------------------------------
# Small helpers
# ----------------------------------------------------------------------------
def _row_tile(H, W, target_rows, override=None):
    """Largest divisor of H whose tile has at most `target_rows` matmul rows."""
    if override is not None and H % override == 0:
        return override
    for t in range(H, 0, -1):
        if H % t == 0 and t * W <= target_rows:
            return t
    return 1


def _vmem_limit(block_bytes, scratch_bytes=0):
    # Double-buffered blocks + persistent scratch + headroom, clamped so the
    # request stays inside v7x's 64 MiB per-TensorCore VMEM.
    total = 2 * block_bytes + scratch_bytes + (4 << 20)
    return int(min(max(total, 32 << 20), 64 << 20))


# ----------------------------------------------------------------------------
# In-kernel helpers
# ----------------------------------------------------------------------------
def _silu_f32(y):
    # exp and the approximate reciprocal both ride the (otherwise idle) EUP slot.
    return y * pl.reciprocal(1.0 + jnp.exp(-y), approx=True)


def _norm_silu(v, sc, sh, out_dtype):
    # Precomputed per-channel GN affine + SiLU, f32 math, single bf16 cast.
    return _silu_f32(v.astype(jnp.float32) * sc + sh).astype(out_dtype)


def _fill_padded(xpad_ref, main, top, bot, hi, n_hi):
    """Write the (TH+2, W+2, C) zero-padded bf16 slab for this row tile.

    `main` is (TH, W, C); `top`/`bot` are (1, W, C) halo rows (already
    normalized), masked to zero at the image boundary (conv zero padding).
    Only the two pad columns are re-zeroed; everything else is overwritten.
    """
    th, W, c = main.shape
    dt = xpad_ref.dtype
    xpad_ref[1:th + 1, 1:W + 1, :] = main
    xpad_ref[0:1, 1:W + 1, :] = jnp.where(hi > 0, top, jnp.zeros_like(top))
    xpad_ref[th + 1:th + 2, 1:W + 1, :] = jnp.where(hi < n_hi - 1, bot,
                                                    jnp.zeros_like(bot))
    zcol = jnp.zeros((th + 2, 1, c), dt)
    xpad_ref[:, 0:1, :] = zcol
    xpad_ref[:, W + 1:W + 2, :] = zcol


def _conv3x3_rows(xpad_ref, w_ref, th, W, cin, cout):
    """3x3 conv over the padded bf16 slab as 3 matmuls (dx taps fused, K=3*Cin).

    w_ref rows are ordered (dy, dx, cin) -- OIHW weights packed as
    (kh, kw, i, o).reshape(9*Cin, Cout).  Returns an (TH*W, Cout) f32 value.
    """
    acc = jnp.zeros((th * W, cout), jnp.float32)
    for dy in range(3):
        slab = xpad_ref[dy:dy + th, :, :]                       # (TH, W+2, Cin) bf16
        lhs = jnp.concatenate(
            [slab[:, 0:W, :], slab[:, 1:W + 1, :], slab[:, 2:W + 2, :]],
            axis=-1).reshape(th * W, 3 * cin)                   # (TH*W, 3*Cin) bf16
        rhs = w_ref[dy * 3 * cin:(dy + 1) * 3 * cin, :]         # (3*Cin, Cout) bf16
        acc = acc + jnp.dot(lhs, rhs, preferred_element_type=jnp.float32)
    return acc


# ----------------------------------------------------------------------------
# Kernels
# ----------------------------------------------------------------------------
def _stats_kernel(x_ref, s_ref, sq_ref):
    # Per-(batch, row-tile, channel) partial sums of x and x*x (no accumulation
    # across grid steps -> both grid axes can be "parallel").
    C = x_ref.shape[3]
    x = x_ref[0].reshape(x_ref.shape[1] * x_ref.shape[2], C)
    s_ref[0, 0] = jnp.sum(x, axis=0, keepdims=True)
    sq_ref[0, 0] = jnp.sum(x * x, axis=0, keepdims=True)


def _gn_silu_conv_time_kernel(x_ref, xt_ref, xb_ref, sc_ref, sh_ref, w_ref, bt_ref,
                              out_ref, s_ref, sq_ref, xpad_ref):
    # GN1 affine + SiLU + 3x3 conv + (bias + temb) for one (batch, row-tile);
    # emits per-tile per-channel partial sums of the result for GN2.
    hi = pl.program_id(1)
    n_hi = pl.num_programs(1)
    th, W, cin = x_ref.shape[1], x_ref.shape[2], x_ref.shape[3]
    cout = w_ref.shape[1]
    sc, sh = sc_ref[0], sh_ref[0]
    dt = xpad_ref.dtype

    _fill_padded(xpad_ref,
                 _norm_silu(x_ref[0], sc, sh, dt),
                 _norm_silu(xt_ref[0], sc, sh, dt),
                 _norm_silu(xb_ref[0], sc, sh, dt),
                 hi, n_hi)

    acc = _conv3x3_rows(xpad_ref, w_ref, th, W, cin, cout) + bt_ref[0]  # f32
    out_ref[0] = acc.reshape(th, W, cout).astype(out_ref.dtype)         # bf16 h
    s_ref[0, 0] = jnp.sum(acc, axis=0, keepdims=True)
    sq_ref[0, 0] = jnp.sum(acc * acc, axis=0, keepdims=True)


def _gn_silu_conv_res_kernel(y_ref, yt_ref, yb_ref, sc_ref, sh_ref, w_ref, b_ref,
                             res_ref, out_ref, xpad_ref):
    # GN2 affine + SiLU + 3x3 conv + bias + identity residual add.
    hi = pl.program_id(1)
    n_hi = pl.num_programs(1)
    th, W, cmid = y_ref.shape[1], y_ref.shape[2], y_ref.shape[3]
    cout = w_ref.shape[1]
    sc, sh = sc_ref[0], sh_ref[0]
    dt = xpad_ref.dtype

    _fill_padded(xpad_ref,
                 _norm_silu(y_ref[0], sc, sh, dt),
                 _norm_silu(yt_ref[0], sc, sh, dt),
                 _norm_silu(yb_ref[0], sc, sh, dt),
                 hi, n_hi)

    acc = _conv3x3_rows(xpad_ref, w_ref, th, W, cmid, cout) + b_ref[0]
    out_ref[0] = acc.reshape(th, W, cout) + res_ref[0]


def _gn_silu_conv_resproj_kernel(y_ref, yt_ref, yb_ref, sc_ref, sh_ref, w_ref,
                                 b_ref, res_ref, wres_ref, bres_ref,
                                 out_ref, xpad_ref):
    # Same as above but with a fused 1x1 residual projection (Cin != Cout).
    hi = pl.program_id(1)
    n_hi = pl.num_programs(1)
    th, W, cmid = y_ref.shape[1], y_ref.shape[2], y_ref.shape[3]
    cin = res_ref.shape[3]
    cout = w_ref.shape[1]
    sc, sh = sc_ref[0], sh_ref[0]
    dt = xpad_ref.dtype

    _fill_padded(xpad_ref,
                 _norm_silu(y_ref[0], sc, sh, dt),
                 _norm_silu(yt_ref[0], sc, sh, dt),
                 _norm_silu(yb_ref[0], sc, sh, dt),
                 hi, n_hi)

    acc = _conv3x3_rows(xpad_ref, w_ref, th, W, cmid, cout) + b_ref[0]
    res = jnp.dot(res_ref[0].reshape(th * W, cin).astype(jnp.bfloat16),
                  wres_ref[...], preferred_element_type=jnp.float32) + bres_ref[0]
    out_ref[0] = (acc + res).reshape(th, W, cout)


# ----------------------------------------------------------------------------
# pallas_call wrappers
# ----------------------------------------------------------------------------
def _channel_stats(x):
    B, H, W, C = x.shape
    th = _row_tile(H, W, target_rows=4096)   # large row tiles: this is a pure-BW pass
    nt = H // th
    vlim = _vmem_limit(th * W * C * 4 + 2 * C * 4)
    return pl.pallas_call(
        _stats_kernel,
        out_shape=(jax.ShapeDtypeStruct((B, nt, 1, C), jnp.float32),
                   jax.ShapeDtypeStruct((B, nt, 1, C), jnp.float32)),
        grid=(B, nt),
        in_specs=[pl.BlockSpec((1, th, W, C), lambda b, i: (b, i, 0, 0))],
        out_specs=[pl.BlockSpec((1, 1, 1, C), lambda b, i: (b, i, 0, 0)),
                   pl.BlockSpec((1, 1, 1, C), lambda b, i: (b, i, 0, 0))],
        compiler_params=pltpu.CompilerParams(
            dimension_semantics=("parallel", "parallel"),
            vmem_limit_bytes=vlim),
    )(x)


def _halo_maps(th, H):
    def x_map(b, i): return (b, i, 0, 0)
    def top_map(b, i): return (b, jnp.maximum(i * th - 1, 0), 0, 0)
    def bot_map(b, i): return (b, jnp.minimum(i * th + th, H - 1), 0, 0)
    return x_map, top_map, bot_map


def _conv1_call(x, sc, sh, w1, bt, row_tile=None):
    B, H, W, Cin = x.shape
    Cout = w1.shape[1]
    th = _row_tile(H, W, target_rows=1024, override=row_tile)
    nh = H // th
    x_map, top_map, bot_map = _halo_maps(th, H)

    block_bytes = (th * W * Cin * 4 + 2 * W * Cin * 4 + 2 * Cin * 4
                   + 9 * Cin * Cout * 2 + Cout * 4
                   + th * W * Cout * 2 + 2 * Cout * 4)
    scratch_bytes = (th + 2) * (W + 2) * Cin * 2
    vlim = _vmem_limit(block_bytes, scratch_bytes)

    return pl.pallas_call(
        _gn_silu_conv_time_kernel,
        out_shape=(jax.ShapeDtypeStruct((B, H, W, Cout), jnp.bfloat16),
                   jax.ShapeDtypeStruct((B, nh, 1, Cout), jnp.float32),
                   jax.ShapeDtypeStruct((B, nh, 1, Cout), jnp.float32)),
        grid=(B, nh),
        in_specs=[
            pl.BlockSpec((1, th, W, Cin), x_map),
            pl.BlockSpec((1, 1, W, Cin), top_map),
            pl.BlockSpec((1, 1, W, Cin), bot_map),
            pl.BlockSpec((1, 1, Cin), lambda b, i: (b, 0, 0)),
            pl.BlockSpec((1, 1, Cin), lambda b, i: (b, 0, 0)),
            pl.BlockSpec((9 * Cin, Cout), lambda b, i: (0, 0)),
            pl.BlockSpec((1, 1, Cout), lambda b, i: (b, 0, 0)),
        ],
        out_specs=[
            pl.BlockSpec((1, th, W, Cout), x_map),
            pl.BlockSpec((1, 1, 1, Cout), lambda b, i: (b, i, 0, 0)),
            pl.BlockSpec((1, 1, 1, Cout), lambda b, i: (b, i, 0, 0)),
        ],
        scratch_shapes=[pltpu.VMEM((th + 2, W + 2, Cin), jnp.bfloat16)],
        compiler_params=pltpu.CompilerParams(
            dimension_semantics=("parallel", "parallel"),
            vmem_limit_bytes=vlim),
    )(x, x, x, sc, sh, w1, bt)


def _conv2_call(y, sc, sh, w2, b2, res, row_tile=None):
    B, H, W, Cmid = y.shape
    Cout = w2.shape[1]
    th = _row_tile(H, W, target_rows=1024, override=row_tile)
    nh = H // th
    x_map, top_map, bot_map = _halo_maps(th, H)

    block_bytes = (th * W * Cmid * 2 + 2 * W * Cmid * 2 + 2 * Cmid * 4
                   + 9 * Cmid * Cout * 2 + Cout * 4
                   + th * W * Cout * 4 + th * W * Cout * 4)
    scratch_bytes = (th + 2) * (W + 2) * Cmid * 2
    vlim = _vmem_limit(block_bytes, scratch_bytes)

    return pl.pallas_call(
        _gn_silu_conv_res_kernel,
        out_shape=jax.ShapeDtypeStruct((B, H, W, Cout), jnp.float32),
        grid=(B, nh),
        in_specs=[
            pl.BlockSpec((1, th, W, Cmid), x_map),
            pl.BlockSpec((1, 1, W, Cmid), top_map),
            pl.BlockSpec((1, 1, W, Cmid), bot_map),
            pl.BlockSpec((1, 1, Cmid), lambda b, i: (b, 0, 0)),
            pl.BlockSpec((1, 1, Cmid), lambda b, i: (b, 0, 0)),
            pl.BlockSpec((9 * Cmid, Cout), lambda b, i: (0, 0)),
            pl.BlockSpec((1, 1, Cout), lambda b, i: (0, 0, 0)),
            pl.BlockSpec((1, th, W, Cout), x_map),
        ],
        out_specs=pl.BlockSpec((1, th, W, Cout), x_map),
        scratch_shapes=[pltpu.VMEM((th + 2, W + 2, Cmid), jnp.bfloat16)],
        compiler_params=pltpu.CompilerParams(
            dimension_semantics=("parallel", "parallel"),
            vmem_limit_bytes=vlim),
    )(y, y, y, sc, sh, w2, b2, res)


def _conv2_proj_call(y, sc, sh, w2, b2, res, wres, bres, row_tile=None):
    B, H, W, Cmid = y.shape
    Cout = w2.shape[1]
    Cin = res.shape[3]
    th = _row_tile(H, W, target_rows=1024, override=row_tile)
    nh = H // th
    x_map, top_map, bot_map = _halo_maps(th, H)

    block_bytes = (th * W * Cmid * 2 + 2 * W * Cmid * 2 + 2 * Cmid * 4
                   + 9 * Cmid * Cout * 2 + Cout * 4
                   + th * W * Cin * 4 + Cin * Cout * 2 + Cout * 4
                   + th * W * Cout * 4)
    scratch_bytes = (th + 2) * (W + 2) * Cmid * 2
    vlim = _vmem_limit(block_bytes, scratch_bytes)

    return pl.pallas_call(
        _gn_silu_conv_resproj_kernel,
        out_shape=jax.ShapeDtypeStruct((B, H, W, Cout), jnp.float32),
        grid=(B, nh),
        in_specs=[
            pl.BlockSpec((1, th, W, Cmid), x_map),
            pl.BlockSpec((1, 1, W, Cmid), top_map),
            pl.BlockSpec((1, 1, W, Cmid), bot_map),
            pl.BlockSpec((1, 1, Cmid), lambda b, i: (b, 0, 0)),
            pl.BlockSpec((1, 1, Cmid), lambda b, i: (b, 0, 0)),
            pl.BlockSpec((9 * Cmid, Cout), lambda b, i: (0, 0)),
            pl.BlockSpec((1, 1, Cout), lambda b, i: (0, 0, 0)),
            pl.BlockSpec((1, th, W, Cin), x_map),
            pl.BlockSpec((Cin, Cout), lambda b, i: (0, 0)),
            pl.BlockSpec((1, 1, Cout), lambda b, i: (0, 0, 0)),
        ],
        out_specs=pl.BlockSpec((1, th, W, Cout), x_map),
        scratch_shapes=[pltpu.VMEM((th + 2, W + 2, Cmid), jnp.bfloat16)],
        compiler_params=pltpu.CompilerParams(
            dimension_semantics=("parallel", "parallel"),
            vmem_limit_bytes=vlim),
    )(y, y, y, sc, sh, w2, b2, res, wres, bres)


# ----------------------------------------------------------------------------
# JAX glue (tiny group math + time path)
# ----------------------------------------------------------------------------
def _group_affine(s, sq, gamma, beta, hw):
    # s, sq: (B, n_tiles, 1, C) per-tile per-channel sums -> GN affine.
    s = s.sum(axis=(1, 2))          # (B, C)
    sq = sq.sum(axis=(1, 2))
    B, C = s.shape
    cpg = C // NUM_GROUPS
    count = float(hw * cpg)
    gs = s.reshape(B, NUM_GROUPS, cpg).sum(axis=-1)
    gsq = sq.reshape(B, NUM_GROUPS, cpg).sum(axis=-1)
    mean = gs / count
    var = jnp.maximum(gsq / count - mean * mean, 0.0)
    inv = jax.lax.rsqrt(var + EPS)
    inv_c = jnp.repeat(inv, cpg, axis=1)                      # (B, C)
    mean_c = jnp.repeat(mean, cpg, axis=1)
    scale = inv_c * gamma[None, :]
    shift = beta[None, :] - mean_c * scale
    return scale[:, None, :], shift[:, None, :]               # (B, 1, C) f32


def unet_residual_block_pallas(feature_nchw, time, params, row_tile=None):
    B, Cin, H, W = feature_nchw.shape
    Cout = params["conv1_w"].shape[0]

    x = jnp.transpose(feature_nchw, (0, 2, 3, 1))             # (B, H, W, Cin) f32

    # Time path in plain JAX (tiny matmul); folded into the conv1 bias row.
    t = time * jax.nn.sigmoid(time)
    temb = t @ params["lin_w"].T + params["lin_b"]            # (B, Cout)
    bt = (temb + params["conv1_b"][None, :])[:, None, :]      # (B, 1, Cout)

    # GroupNorm 1: Pallas per-tile partial sums + tiny group math in the wrapper.
    s1, sq1 = _channel_stats(x)
    sc1, sh1 = _group_affine(s1, sq1, params["gn1_gamma"], params["gn1_beta"], H * W)

    # Fused: gn1-affine + SiLU + 3x3 conv + bias/time; emits GN2 partial sums,
    # intermediate h is bf16.
    w1 = jnp.transpose(params["conv1_w"], (2, 3, 1, 0)).reshape(9 * Cin, Cout)
    h, s2, sq2 = _conv1_call(x, sc1, sh1, w1.astype(jnp.bfloat16), bt, row_tile)

    sc2, sh2 = _group_affine(s2, sq2, params["gn2_gamma"], params["gn2_beta"], H * W)

    # Fused: gn2-affine + SiLU + 3x3 conv + bias + residual add.
    w2 = jnp.transpose(params["conv2_w"], (2, 3, 1, 0)).reshape(9 * Cout, Cout)
    b2 = params["conv2_b"][None, None, :]
    if Cin == Cout:
        out = _conv2_call(h, sc2, sh2, w2.astype(jnp.bfloat16), b2, x, row_tile)
    else:
        # 1x1 residual projection (original source has an nn.conv2d typo here).
        wres = jnp.transpose(params["res_w"], (2, 3, 1, 0)).reshape(Cin, Cout)
        bres = params["res_b"][None, None, :]
        out = _conv2_proj_call(h, sc2, sh2, w2.astype(jnp.bfloat16), b2, x,
                               wres.astype(jnp.bfloat16), bres, row_tile)

    return jnp.transpose(out, (0, 3, 1, 2))


# ----------------------------------------------------------------------------
# Deterministic synthetic parameters + pure-JAX reference
# ----------------------------------------------------------------------------
def init_params(key, in_channels, out_channels, n_time):
    ks = jax.random.split(key, 12)
    f32 = jnp.float32
    p = {
        "gn1_gamma": 1.0 + 0.1 * jax.random.normal(ks[0], (in_channels,), f32),
        "gn1_beta": 0.1 * jax.random.normal(ks[1], (in_channels,), f32),
        "conv1_w": 0.05 * jax.random.normal(ks[2], (out_channels, in_channels, 3, 3), f32),
        "conv1_b": 0.05 * jax.random.normal(ks[3], (out_channels,), f32),
        "lin_w": 0.05 * jax.random.normal(ks[4], (out_channels, n_time), f32),
        "lin_b": 0.05 * jax.random.normal(ks[5], (out_channels,), f32),
        "gn2_gamma": 1.0 + 0.1 * jax.random.normal(ks[6], (out_channels,), f32),
        "gn2_beta": 0.1 * jax.random.normal(ks[7], (out_channels,), f32),
        "conv2_w": 0.05 * jax.random.normal(ks[8], (out_channels, out_channels, 3, 3), f32),
        "conv2_b": 0.05 * jax.random.normal(ks[9], (out_channels,), f32),
    }
    if in_channels != out_channels:
        p["res_w"] = 0.05 * jax.random.normal(ks[10], (out_channels, in_channels, 1, 1), f32)
        p["res_b"] = 0.05 * jax.random.normal(ks[11], (out_channels,), f32)
    return p


def reference(feature, time, params):
    def gn(x, gamma, beta):
        B, C, H, W = x.shape
        cpg = C // NUM_GROUPS
        xg = x.reshape(B, NUM_GROUPS, cpg, H, W)
        mean = xg.mean(axis=(2, 3, 4), keepdims=True)
        var = xg.var(axis=(2, 3, 4), keepdims=True)
        xn = ((xg - mean) / jnp.sqrt(var + EPS)).reshape(B, C, H, W)
        return xn * gamma[None, :, None, None] + beta[None, :, None, None]

    def silu(v):
        return v * jax.nn.sigmoid(v)

    def conv(x, w, b, pad):
        y = jax.lax.conv_general_dilated(
            x, w, (1, 1), [(pad, pad), (pad, pad)],
            dimension_numbers=("NCHW", "OIHW", "NCHW"))
        return y + b[None, :, None, None]

    residue = feature
    h = silu(gn(feature, params["gn1_gamma"], params["gn1_beta"]))
    h = conv(h, params["conv1_w"], params["conv1_b"], 1)
    t = silu(time) @ params["lin_w"].T + params["lin_b"]
    m = h + t[:, :, None, None]
    m = silu(gn(m, params["gn2_gamma"], params["gn2_beta"]))
    m = conv(m, params["conv2_w"], params["conv2_b"], 1)
    if "res_w" in params:
        res = conv(residue, params["res_w"], params["res_b"], 0)
    else:
        res = residue
    return m + res


if __name__ == "__main__":
    key = jax.random.PRNGKey(0)
    n_time = 1280
    B, H, W = 2, 16, 16
    # (Cin == Cout -> identity residual) and (Cin != Cout -> 1x1 projection).
    for (cin, cout) in [(64, 64), (64, 128)]:
        key, k1, k2, k3 = jax.random.split(key, 4)
        feature = jax.random.normal(k1, (B, cin, H, W), jnp.float32)
        time = jax.random.normal(k2, (B, n_time), jnp.float32)
        params = init_params(k3, cin, cout, n_time)

        # row_tile=8 forces 2 row tiles per image so the halo path is exercised.
        out = unet_residual_block_pallas(feature, time, params, row_tile=8)
        out = jax.block_until_ready(out)

        ref = reference(feature, time, params)
        # bf16 matmul operands + bf16 intermediate h (f32 accumulate everywhere)
        # vs the f32 reference -> looser tolerance.
        np.testing.assert_allclose(np.asarray(out), np.asarray(ref),
                                   rtol=2e-2, atol=3e-2)
    print("KERNEL_OK")
</pallas_src>

<mosaic_0001>
module attributes {stable_mosaic.version = 11 : i64} {
  func.func @_stats_kernel(%arg0: i32, %arg1: i32, %arg2: memref<1x16x16x64xf32, #tpu.memory_space<vmem>>, %arg3: memref<1x1x1x64xf32, #tpu.memory_space<vmem>>, %arg4: memref<1x1x1x64xf32, #tpu.memory_space<vmem>>) attributes {dimension_semantics = [#tpu.dimension_semantics<parallel>, #tpu.dimension_semantics<parallel>], iteration_bounds = array<i64: 2, 1>, scalar_prefetch = 0 : i64, scratch_operands = 0 : i64, tpu.core_type = #tpu.core_type<tc>, window_params = [{transform_indices = @transform_0, window_bounds = array<i64: 1, 16, 16, 64>}, {transform_indices = @transform_1, window_bounds = array<i64: 1, 1, 1, 64>}, {transform_indices = @transform_2, window_bounds = array<i64: 1, 1, 1, 64>}]} {
    %c0 = arith.constant 0 : index
    %c0_0 = arith.constant 0 : index
    %c0_1 = arith.constant 0 : index
    %c0_2 = arith.constant 0 : index
    %0 = vector.load %arg2[%c0, %c0_0, %c0_1, %c0_2] : memref<1x16x16x64xf32, #tpu.memory_space<vmem>>, vector<1x16x16x64xf32>
    %1 = vector.shape_cast %0 : vector<1x16x16x64xf32> to vector<16x16x64xf32>
    %2 = vector.shape_cast %1 : vector<16x16x64xf32> to vector<256x64xf32>
    %cst = arith.constant dense<0.000000e+00> : vector<64xf32>
    %3 = vector.multi_reduction <add>, %2, %cst [0] : vector<256x64xf32> to vector<64xf32>
    %4 = vector.shape_cast %3 : vector<64xf32> to vector<1x64xf32>
    %c0_3 = arith.constant 0 : index
    %c0_4 = arith.constant 0 : index
    %c0_5 = arith.constant 0 : index
    %c0_6 = arith.constant 0 : index
    %5 = vector.load %arg3[%c0_3, %c0_4, %c0_5, %c0_6] : memref<1x1x1x64xf32, #tpu.memory_space<vmem>>, vector<1x1x1x64xf32>
    %6 = vector.shape_cast %5 : vector<1x1x1x64xf32> to vector<1x64xf32>
    %7 = vector.shape_cast %4 : vector<1x64xf32> to vector<1x1x1x64xf32>
    tpu.vector_store %arg3[%c0_3, %c0_4, %c0_5, %c0_6], %7 {strides = array<i32>} : memref<1x1x1x64xf32, #tpu.memory_space<vmem>>, vector<1x1x1x64xf32>,
    %8 = arith.mulf %2, %2 : vector<256x64xf32>
    %cst_7 = arith.constant dense<0.000000e+00> : vector<64xf32>
    %9 = vector.multi_reduction <add>, %8, %cst_7 [0] : vector<256x64xf32> to vector<64xf32>
    %10 = vector.shape_cast %9 : vector<64xf32> to vector<1x64xf32>
    %c0_8 = arith.constant 0 : index
    %c0_9 = arith.constant 0 : index
    %c0_10 = arith.constant 0 : index
    %c0_11 = arith.constant 0 : index
    %11 = vector.load %arg4[%c0_8, %c0_9, %c0_10, %c0_11] : memref<1x1x1x64xf32, #tpu.memory_space<vmem>>, vector<1x1x1x64xf32>
    %12 = vector.shape_cast %11 : vector<1x1x1x64xf32> to vector<1x64xf32>
    %13 = vector.shape_cast %10 : vector<1x64xf32> to vector<1x1x1x64xf32>
    tpu.vector_store %arg4[%c0_8, %c0_9, %c0_10, %c0_11], %13 {strides = array<i32>} : memref<1x1x1x64xf32, #tpu.memory_space<vmem>>, vector<1x1x1x64xf32>,
    return
  }
  func.func @transform_0(%arg0: i32, %arg1: i32) -> (i32, i32, i32, i32) {
    %c0_i32 = arith.constant 0 : i32
    %c0_i32_0 = arith.constant 0 : i32
    %c0_i32_1 = arith.constant 0 : i32
    return %arg0, %arg1, %c0_i32, %c0_i32_0 : i32, i32, i32, i32
  }
  func.func @transform_1(%arg0: i32, %arg1: i32) -> (i32, i32, i32, i32) {
    %c0_i32 = arith.constant 0 : i32
    %c0_i32_0 = arith.constant 0 : i32
    %c0_i32_1 = arith.constant 0 : i32
    return %arg0, %arg1, %c0_i32, %c0_i32_0 : i32, i32, i32, i32
  }
  func.func @transform_2(%arg0: i32, %arg1: i32) -> (i32, i32, i32, i32) {
    %c0_i32 = arith.constant 0 : i32
    %c0_i32_0 = arith.constant 0 : i32
    %c0_i32_1 = arith.constant 0 : i32
    return %arg0, %arg1, %c0_i32, %c0_i32_0 : i32, i32, i32, i32
  }
}

</mosaic_0001>

<llo_original>
// kernel: tpu_custom_call.1
$region0: #{tpu_custom_call.1}
  #allocation0 [shape = 'u32[]', space=smem, size = 0x4, offset = 0x4, fixed_abs, tag = 'smem constant byte address 0x4 - core index']
  #allocation1 [shape = 'u32[144,128]{1,0:T(1,128)}', space=vmem, size = 0x12000, scoped, tag = 'internal scratch']
  %s0 = inlined_call_operand.hbm [shape: f32[2,16,16,64], index: 0, kind: input, shape index: {}]
  %s1 = inlined_call_operand.hbm [shape: f32[2,1,1,64], index: 1, kind: output, shape index: {0}]
  %s2 = inlined_call_operand.hbm [shape: f32[2,1,1,64], index: 2, kind: output, shape index: {1}]
  %3 = xla_tuple %s1, %s2
  %s4 = sld [smem:[#allocation0]]
  $region49: #{tpu_custom_call.1} parent=0
    _
  %s6 = ssub.s32 1, %s4
  %s7 = scalar_select 0, %s6, %s4
  $region1: #{tpu_custom_call.1} parent=0
    #allocation2 [shape = 'u8[262144]{0}', space=vmem, size = 0x40000, scoped, tag = 'input window, operand 0']
    #allocation3 [shape = 's32[2]{0}', space=sflag, size = 0x8, scoped, tag = 'scoped memory for tpu_custom_call.1']
    #allocation4 [shape = 's32[2]{0}', space=sflag, size = 0x8, scoped, tag = 'scoped memory for tpu_custom_call.1']
    #allocation5 [shape = 'u8[1024]{0}', space=vmem, size = 0x400, scoped, tag = 'output window, operand 0']
    #allocation6 [shape = 'u8[1024]{0}', space=vmem, size = 0x400, scoped, tag = 'output window, operand 1']
    #allocation7 [shape = 's32[2]{0}', space=sflag, size = 0x8, scoped, tag = 'scoped memory for tpu_custom_call.1']
    %8 = vsyncpa [#allocation3], 0
    %s9 = scalar_lea.sflag [#allocation3], 1
    %10 = vsyncpa %s9, 0
    %11 = vsyncpa [#allocation4], 0
    %s12 = scalar_lea.sflag [#allocation4], 1
    %13 = vsyncpa %s12, 0
    %14 = vsyncpa [#allocation7], 0
    %s15 = scalar_lea.sflag [#allocation7], 1
    %16 = vsyncpa %s15, 0
    loop: start=0, step=1, limit=4
    $region2: #{tpu_custom_call.1} parent=1 // loop_pre_header
      _
    $region3: #{tpu_custom_call.1} parent=1 // loop_header
      %s18 = sphi 0, %s22
      %p19 = scmp.ge.s32.totalorder %s18, 4
      %s25 = sphi 0, %s37
      %s26 = sphi 0, %s33
      %s27 = sphi 0, %s25
      %s28 = sphi 0, %s26
      %s29 = sphi 0, %s27
      %s30 = sphi 0, %s28
      %s42 = sphi 0, %s44
      %s45 = sphi 0, %s42
      %s46 = sphi 0, %s45
      %s62 = sphi 0, %s46
      %s70 = sphi 0, %s72
      %s73 = sphi 0, %s70
      %s74 = sphi 0, %s73
      %s90 = sphi 0, %s74
      %s98 = sphi 0, %s100
      %s101 = sphi 0, %s98
      %s102 = sphi 0, %s101
      %s118 = sphi 0, %s102
    $region4: #{tpu_custom_call.1} parent=1 // loop_header_branch
      %21 = sbr.rel (%p19) target = $region8
    $region5: #{tpu_custom_call.1} parent=1 // loop_body
      %s23 = ssub.s32 %s18, 1
      %s24 = ssub.s32 %s18, 2
      %s31 = sadd.s32 1, %s26
      %p32 = scmp.ge.s32.totalorder %s31, 1
      %s33 = scalar_select %p32, 0, %s31
      %s34 = sadd.s32 1, %s25
      %s35 = scalar_select %p32, %s34, %s25
      %p36 = scmp.ge.s32.totalorder %s35, 2
      %s37 = scalar_select %p36, 0, %s35
      %s38 = ssub.s32 %s25, %s37
      %s39 = ssub.s32 %s26, %s33
      %s40 = sor.u32 %s38, %s39
      %p41 = scmp.eq.s32.totalorder %s40, 0
      %s43 = sadd.s32 %s42, 1
      %s44 = scalar_select %p41, %s42, %s43
      %p47 = pneg %p41
      %p48 = scmp.eq.s32.totalorder %s18, 1
      %p49 = por %p47, %p48
      %p50 = scmp.ne.s32.totalorder %s42, %s45
      %p51 = scmp.eq.s32.totalorder %s18, 0
      %p52 = por %p50, %p51
      %p53 = scmp.ne.s32.totalorder %s42, %s45
      %p54 = scmp.eq.s32.totalorder %s23, 1
      %p55 = por %p53, %p54
      %p56 = scmp.ne.s32.totalorder %s45, %s46
      %p57 = scmp.eq.s32.totalorder %s23, 0
      %p58 = por %p56, %p57
      %p59 = scmp.ne.s32.totalorder %s45, %s46
      %p60 = scmp.eq.s32.totalorder %s24, 1
      %p61 = por %p59, %p60
      %p63 = scmp.ne.s32.totalorder %s46, %s62
      %p64 = scmp.eq.s32.totalorder %s24, 0
      %p65 = por %p63, %p64
      %s66 = ssub.s32 %s25, %s37
      %s67 = ssub.s32 %s26, %s33
      %s68 = sor.u32 %s66, %s67
      %p69 = scmp.eq.s32.totalorder %s68, 0
      %s71 = sadd.s32 %s70, 1
      %s72 = scalar_select %p69, %s70, %s71
      %p75 = pneg %p69
      %p76 = scmp.eq.s32.totalorder %s18, 1
      %p77 = por %p75, %p76
      %p78 = scmp.ne.s32.totalorder %s70, %s73
      %p79 = scmp.eq.s32.totalorder %s18, 0
      %p80 = por %p78, %p79
      %p81 = scmp.ne.s32.totalorder %s70, %s73
      %p82 = scmp.eq.s32.totalorder %s23, 1
      %p83 = por %p81, %p82
      %p84 = scmp.ne.s32.totalorder %s73, %s74
      %p85 = scmp.eq.s32.totalorder %s23, 0
      %p86 = por %p84, %p85
      %p87 = scmp.ne.s32.totalorder %s73, %s74
      %p88 = scmp.eq.s32.totalorder %s24, 1
      %p89 = por %p87, %p88
      %p91 = scmp.ne.s32.totalorder %s74, %s90
      %p92 = scmp.eq.s32.totalorder %s24, 0
      %p93 = por %p91, %p92
      %s94 = ssub.s32 %s25, %s37
      %s95 = ssub.s32 %s26, %s33
      %s96 = sor.u32 %s94, %s95
      %p97 = scmp.eq.s32.totalorder %s96, 0
      %s99 = sadd.s32 %s98, 1
      %s100 = scalar_select %p97, %s98, %s99
      %p103 = pneg %p97
      %p104 = scmp.eq.s32.totalorder %s18, 1
      %p105 = por %p103, %p104
      %p106 = scmp.ne.s32.totalorder %s98, %s101
      %p107 = scmp.eq.s32.totalorder %s18, 0
      %p108 = por %p106, %p107
      %p109 = scmp.ne.s32.totalorder %s98, %s101
      %p110 = scmp.eq.s32.totalorder %s23, 1
      %p111 = por %p109, %p110
      %p112 = scmp.ne.s32.totalorder %s101, %s102
      %p113 = scmp.eq.s32.totalorder %s23, 0
      %p114 = por %p112, %p113
      %p115 = scmp.ne.s32.totalorder %s101, %s102
      %p116 = scmp.eq.s32.totalorder %s24, 1
      %p117 = por %p115, %p116
      %p119 = scmp.ne.s32.totalorder %s102, %s118
      %p120 = scmp.eq.s32.totalorder %s24, 0
      %p121 = por %p119, %p120
      %p122 = scmp.le.s32.totalorder 1, %s18
      %p123 = scmp.lt.s32.totalorder %s18, 3
      %p124 = pnand %p122, %p123
      %p125 = pneg %p124
      // Predicated region
      $region9: #{tpu_custom_call.1} parent=5 // pred_check
        _
      $region10: #{tpu_custom_call.1} parent=5 // pred_check_branch
        %127 = sbr.rel (%p124) target = $region12
      $region11: #{tpu_custom_call.1} parent=5 // pred_region
        %s128 = ssub.s32 %s18, 1
      $region12: #{tpu_custom_call.1} parent=5 // pred_fallthru
        _
      %p129 = scmp.lt.s32.totalorder %s18, 2
      // Predicated region
      $region13: #{tpu_custom_call.1} parent=5 // pred_check
        %p130 = pneg %p129
      $region14: #{tpu_custom_call.1} parent=5 // pred_check_branch
        %132 = sbr.rel (%p130) target = $region16
      $region15: #{tpu_custom_call.1} parent=5 // pred_region
        // Predicated region
        $region17: #{tpu_custom_call.1} parent=15 // pred_check
          %p133 = pneg %p52
        $region18: #{tpu_custom_call.1} parent=15 // pred_check_branch
          %135 = sbr.rel (%p133) target = $region20
        $region19: #{tpu_custom_call.1} parent=15 // pred_region
          %s136 = sand.u32 %s42, 1
          %s137 = scalar_lea.sflag [#allocation3], %s136
          %s138 = sand.u32 %s42, 1
          %s139 = smul.addr %s138, 256
          %s140 = scalar_lea.vmem [#allocation2], %s139
          %s141 = smul.u32 16, %s26
          %s143 = ssub.s32 4096, 4096
          %144 = vsyncadd %s137, %s143
          %s145 = smul.addr %s141, 2
          %s146 = smul.addr %s25, 32
          %s147 = sadd.s32 %s145, %s146
          %s148 = smul.addr %s147, 128
          %s149 = scalar_lea.hbm %s0, %s148
          %s150 = sshll.u32 %s140, 4
          %s151 = int_to_ptr.vmem [resolvable:$true] %s150
          %156 = dma.hbm_to_vmem [thread:$0]  %s149, 4096, %s151, %s137, 128, 128, 8
        $region20: #{tpu_custom_call.1} parent=15 // pred_fallthru
          _
      $region16: #{tpu_custom_call.1} parent=5 // pred_fallthru
        _
      %p157 = scmp.le.s32.totalorder 1, %s18
      %p158 = scmp.lt.s32.totalorder %s18, 3
      %p159 = pnand %p157, %p158
      %p160 = pneg %p159
      // Predicated region
      $region21: #{tpu_custom_call.1} parent=5 // pred_check
        _
      $region22: #{tpu_custom_call.1} parent=5 // pred_check_branch
        %162 = sbr.rel (%p159) target = $region24
      $region23: #{tpu_custom_call.1} parent=5 // pred_region
        %s163 = ssub.s32 %s18, 1
        %s164 = sand.u32 %s45, 1
        %s165 = scalar_lea.sflag [#allocation3], %s164
        %s166 = sand.u32 %s45, 1
        %s167 = smul.addr %s166, 256
        %s168 = scalar_lea.vmem [#allocation2], %s167
        // Predicated region
        $region25: #{tpu_custom_call.1} parent=23 // pred_check
          %p169 = pneg %p58
        $region26: #{tpu_custom_call.1} parent=23 // pred_check_branch
          %171 = sbr.rel (%p169) target = $region28
        $region27: #{tpu_custom_call.1} parent=23 // pred_region
          %172 = dma.done %s165, 4096
        $region28: #{tpu_custom_call.1} parent=23 // pred_fallthru
          _
        %s173 = sand.u32 %s45, 1
        %s174 = scalar_lea.sflag [#allocation3], %s173
        %s175 = sand.u32 %s45, 1
        %s176 = smul.addr %s175, 256
        %s177 = scalar_lea.vmem [#allocation2], %s176
        %p178 = pneg %p58
        %p179 = pneg %p55
        %p180 = pneg %p86
        %p181 = pneg %p83
        %s182 = sand.u32 %s73, 1
        %s183 = scalar_lea.sflag [#allocation4], %s182
        %s184 = sand.u32 %s73, 1
        %s185 = scalar_lea.vmem [#allocation5], %s184
        %p186 = pneg %p114
        %p187 = pneg %p111
        %s188 = sand.u32 %s101, 1
        %s189 = scalar_lea.sflag [#allocation7], %s188
        %s190 = sand.u32 %s101, 1
        %s191 = scalar_lea.vmem [#allocation6], %s190
        %s192 = smul.u32 16, %s28
        %v193 = vld [vmem:[%s168] sm:$0xff]
        %v194 = vld [vmem:[%s168 + $0x8] sm:$0xff]
        %v195 = vld [vmem:[%s168 + $0x10] sm:$0xff]
        %v196 = vld [vmem:[%s168 + $0x18] sm:$0xff]
        %v197 = vld [vmem:[%s168 + $0x20] sm:$0xff]
        %v198 = vld [vmem:[%s168 + $0x28] sm:$0xff]
        %v199 = vld [vmem:[%s168 + $0x30] sm:$0xff]
        %v200 = vld [vmem:[%s168 + $0x38] sm:$0xff]
        %v201 = vld [vmem:[%s168 + $0x40] sm:$0xff]
        %v202 = vld [vmem:[%s168 + $0x48] sm:$0xff]
        %v203 = vld [vmem:[%s168 + $0x50] sm:$0xff]
        %v204 = vld [vmem:[%s168 + $0x58] sm:$0xff]
        %v205 = vld [vmem:[%s168 + $0x60] sm:$0xff]
        %v206 = vld [vmem:[%s168 + $0x68] sm:$0xff]
        %v207 = vld [vmem:[%s168 + $0x70] sm:$0xff]
        %v208 = vld [vmem:[%s168 + $0x78] sm:$0xff]
        %v209 = vld [vmem:[%s168 + $0x80] sm:$0xff]
        %v210 = vld [vmem:[%s168 + $0x88] sm:$0xff]
        %v211 = vld [vmem:[%s168 + $0x90] sm:$0xff]
        %v212 = vld [vmem:[%s168 + $0x98] sm:$0xff]
        %v213 = vld [vmem:[%s168 + $0xa0] sm:$0xff]
        %v214 = vld [vmem:[%s168 + $0xa8] sm:$0xff]
        %v215 = vld [vmem:[%s168 + $0xb0] sm:$0xff]
        %v216 = vld [vmem:[%s168 + $0xb8] sm:$0xff]
        %v217 = vld [vmem:[%s168 + $0xc0] sm:$0xff]
        %v218 = vld [vmem:[%s168 + $0xc8] sm:$0xff]
        %v219 = vld [vmem:[%s168 + $0xd0] sm:$0xff]
        %v220 = vld [vmem:[%s168 + $0xd8] sm:$0xff]
        %v221 = vld [vmem:[%s168 + $0xe0] sm:$0xff]
        %v222 = vld [vmem:[%s168 + $0xe8] sm:$0xff]
        %v223 = vld [vmem:[%s168 + $0xf0] sm:$0xff]
        %v224 = vld [vmem:[%s168 + $0xf8] sm:$0xff]
        %vm225 = vcmask 523264
        %v226 = vsel %vm225, %v193, 0.0
        %v227 = vsel %vm225, %v194, 0.0
        %v228 = vadd.f32 %v226, %v227
        %v229 = vsel %vm225, %v195, 0.0
        %v230 = vadd.f32 %v228, %v229
        %v231 = vsel %vm225, %v196, 0.0
        %v232 = vadd.f32 %v230, %v231
        %v233 = vsel %vm225, %v197, 0.0
        %v234 = vadd.f32 %v232, %v233
        %v235 = vsel %vm225, %v198, 0.0
        %v236 = vadd.f32 %v234, %v235
        %v237 = vsel %vm225, %v199, 0.0
        %v238 = vadd.f32 %v236, %v237
        %v239 = vsel %vm225, %v200, 0.0
        %v240 = vadd.f32 %v238, %v239
        %v241 = vsel %vm225, %v201, 0.0
        %v242 = vadd.f32 %v240, %v241
        %v243 = vsel %vm225, %v202, 0.0
        %v244 = vadd.f32 %v242, %v243
        %v245 = vsel %vm225, %v203, 0.0
        %v246 = vadd.f32 %v244, %v245
        %v247 = vsel %vm225, %v204, 0.0
        %v248 = vadd.f32 %v246, %v247
        %v249 = vsel %vm225, %v205, 0.0
        %v250 = vadd.f32 %v248, %v249
        %v251 = vsel %vm225, %v206, 0.0
        %v252 = vadd.f32 %v250, %v251
        %v253 = vsel %vm225, %v207, 0.0
        %v254 = vadd.f32 %v252, %v253
        %v255 = vsel %vm225, %v208, 0.0
        %v256 = vadd.f32 %v254, %v255
        %v257 = vsel %vm225, %v209, 0.0
        %v258 = vadd.f32 %v256, %v257
        %v259 = vsel %vm225, %v210, 0.0
        %v260 = vadd.f32 %v258, %v259
        %v261 = vsel %vm225, %v211, 0.0
        %v262 = vadd.f32 %v260, %v261
        %v263 = vsel %vm225, %v212, 0.0
        %v264 = vadd.f32 %v262, %v263
        %v265 = vsel %vm225, %v213, 0.0
        %v266 = vadd.f32 %v264, %v265
        %v267 = vsel %vm225, %v214, 0.0
        %v268 = vadd.f32 %v266, %v267
        %v269 = vsel %vm225, %v215, 0.0
        %v270 = vadd.f32 %v268, %v269
        %v271 = vsel %vm225, %v216, 0.0
        %v272 = vadd.f32 %v270, %v271
        %v273 = vsel %vm225, %v217, 0.0
        %v274 = vadd.f32 %v272, %v273
        %v275 = vsel %vm225, %v218, 0.0
        %v276 = vadd.f32 %v274, %v275
        %v277 = vsel %vm225, %v219, 0.0
        %v278 = vadd.f32 %v276, %v277
        %v279 = vsel %vm225, %v220, 0.0
        %v280 = vadd.f32 %v278, %v279
        %v281 = vsel %vm225, %v221, 0.0
        %v282 = vadd.f32 %v280, %v281
        %v283 = vsel %vm225, %v222, 0.0
        %v284 = vadd.f32 %v282, %v283
        %v285 = vsel %vm225, %v223, 0.0
        %v286 = vadd.f32 %v284, %v285
        %v287 = vsel %vm225, %v224, 0.0
        %v288 = vadd.f32 %v286, %v287
        %v289 = vrot.slane %v288, 4
        %v290 = vadd.f32 %v288, %v289
        %v291 = vrot.slane %v290, 2
        %v292 = vadd.f32 %v290, %v291
        %v293 = vrot.slane %v292, 1
        %v294 = vadd.f32 %v292, %v293
        %vm295 = vcmask 516096
        %296 = vst.msk [vmem:[%s185] sm:$0x1] %vm295, %v294
        %v297 = vmul.f32 %v193, %v193
        %v298 = vmul.f32 %v194, %v194
        %v299 = vmul.f32 %v195, %v195
        %v300 = vmul.f32 %v196, %v196
        %v301 = vmul.f32 %v197, %v197
        %v302 = vmul.f32 %v198, %v198
        %v303 = vmul.f32 %v199, %v199
        %v304 = vmul.f32 %v200, %v200
        %v305 = vmul.f32 %v201, %v201
        %v306 = vmul.f32 %v202, %v202
        %v307 = vmul.f32 %v203, %v203
        %v308 = vmul.f32 %v204, %v204
        %v309 = vmul.f32 %v205, %v205
        %v310 = vmul.f32 %v206, %v206
        %v311 = vmul.f32 %v207, %v207
        %v312 = vmul.f32 %v208, %v208
        %v313 = vmul.f32 %v209, %v209
        %v314 = vmul.f32 %v210, %v210
        %v315 = vmul.f32 %v211, %v211
        %v316 = vmul.f32 %v212, %v212
        %v317 = vmul.f32 %v213, %v213
        %v318 = vmul.f32 %v214, %v214
        %v319 = vmul.f32 %v215, %v215
        %v320 = vmul.f32 %v216, %v216
        %v321 = vmul.f32 %v217, %v217
        %v322 = vmul.f32 %v218, %v218
        %v323 = vmul.f32 %v219, %v219
        %v324 = vmul.f32 %v220, %v220
        %v325 = vmul.f32 %v221, %v221
        %v326 = vmul.f32 %v222, %v222
        %v327 = vmul.f32 %v223, %v223
        %v328 = vmul.f32 %v224, %v224
        %v329 = vsel %vm225, %v297, 0.0
        %v330 = vsel %vm225, %v298, 0.0
        %v331 = vadd.f32 %v329, %v330
        %v332 = vsel %vm225, %v299, 0.0
        %v333 = vadd.f32 %v331, %v332
        %v334 = vsel %vm225, %v300, 0.0
        %v335 = vadd.f32 %v333, %v334
        %v336 = vsel %vm225, %v301, 0.0
        %v337 = vadd.f32 %v335, %v336
        %v338 = vsel %vm225, %v302, 0.0
        %v339 = vadd.f32 %v337, %v338
        %v340 = vsel %vm225, %v303, 0.0
        %v341 = vadd.f32 %v339, %v340
        %v342 = vsel %vm225, %v304, 0.0
        %v343 = vadd.f32 %v341, %v342
        %v344 = vsel %vm225, %v305, 0.0
        %v345 = vadd.f32 %v343, %v344
        %v346 = vsel %vm225, %v306, 0.0
        %v347 = vadd.f32 %v345, %v346
        %v348 = vsel %vm225, %v307, 0.0
        %v349 = vadd.f32 %v347, %v348
        %v350 = vsel %vm225, %v308, 0.0
        %v351 = vadd.f32 %v349, %v350
        %v352 = vsel %vm225, %v309, 0.0
        %v353 = vadd.f32 %v351, %v352
        %v354 = vsel %vm225, %v310, 0.0
        %v355 = vadd.f32 %v353, %v354
        %v356 = vsel %vm225, %v311, 0.0
        %v357 = vadd.f32 %v355, %v356
        %v358 = vsel %vm225, %v312, 0.0
        %v359 = vadd.f32 %v357, %v358
        %v360 = vsel %vm225, %v313, 0.0
        %v361 = vadd.f32 %v359, %v360
        %v362 = vsel %vm225, %v314, 0.0
        %v363 = vadd.f32 %v361, %v362
        %v364 = vsel %vm225, %v315, 0.0
        %v365 = vadd.f32 %v363, %v364
        %v366 = vsel %vm225, %v316, 0.0
        %v367 = vadd.f32 %v365, %v366
        %v368 = vsel %vm225, %v317, 0.0
        %v369 = vadd.f32 %v367, %v368
        %v370 = vsel %vm225, %v318, 0.0
        %v371 = vadd.f32 %v369, %v370
        %v372 = vsel %vm225, %v319, 0.0
        %v373 = vadd.f32 %v371, %v372
        %v374 = vsel %vm225, %v320, 0.0
        %v375 = vadd.f32 %v373, %v374
        %v376 = vsel %vm225, %v321, 0.0
        %v377 = vadd.f32 %v375, %v376
        %v378 = vsel %vm225, %v322, 0.0
        %v379 = vadd.f32 %v377, %v378
        %v380 = vsel %vm225, %v323, 0.0
        %v381 = vadd.f32 %v379, %v380
        %v382 = vsel %vm225, %v324, 0.0
        %v383 = vadd.f32 %v381, %v382
        %v384 = vsel %vm225, %v325, 0.0
        %v385 = vadd.f32 %v383, %v384
        %v386 = vsel %vm225, %v326, 0.0
        %v387 = vadd.f32 %v385, %v386
        %v388 = vsel %vm225, %v327, 0.0
        %v389 = vadd.f32 %v387, %v388
        %v390 = vsel %vm225, %v328, 0.0
        %v391 = vadd.f32 %v389, %v390
        %v392 = vrot.slane %v391, 4
        %v393 = vadd.f32 %v391, %v392
        %v394 = vrot.slane %v393, 2
        %v395 = vadd.f32 %v393, %v394
        %v396 = vrot.slane %v395, 1
        %v397 = vadd.f32 %v395, %v396
        %398 = vst.msk [vmem:[%s191] sm:$0x1] %vm295, %v397
        %s399 = sand.u32 %s73, 1
        %s400 = scalar_lea.sflag [#allocation4], %s399
        %s401 = sand.u32 %s73, 1
        %s402 = scalar_lea.vmem [#allocation5], %s401
        %s403 = sand.u32 %s101, 1
        %s404 = scalar_lea.sflag [#allocation7], %s403
        %s405 = sand.u32 %s101, 1
        %s406 = scalar_lea.vmem [#allocation6], %s405
        // Predicated region
        $region29: #{tpu_custom_call.1} parent=23 // pred_check
          %p407 = pneg %p83
        $region30: #{tpu_custom_call.1} parent=23 // pred_check_branch
          %409 = sbr.rel (%p407) target = $region32
        $region31: #{tpu_custom_call.1} parent=23 // pred_region
          %s411 = ssub.s32 16, 16
          %412 = vsyncadd %s400, %s411
          %s413 = sadd.s32 %s28, %s27
          %s414 = smul.addr %s413, 16
          %s415 = scalar_lea.hbm %s1, %s414
          %s417 = sshll.u32 %s402, 4
          %s418 = int_to_ptr.vmem [resolvable:$true] %s417
          %420 = dma.vmem_to_hbm [thread:$0]  %s418, 16, %s415, %s400
        $region32: #{tpu_custom_call.1} parent=23 // pred_fallthru
          _
        // Predicated region
        $region33: #{tpu_custom_call.1} parent=23 // pred_check
          %p421 = pneg %p111
        $region34: #{tpu_custom_call.1} parent=23 // pred_check_branch
          %423 = sbr.rel (%p421) target = $region36
        $region35: #{tpu_custom_call.1} parent=23 // pred_region
          %s425 = ssub.s32 16, 16
          %426 = vsyncadd %s404, %s425
          %s427 = sadd.s32 %s28, %s27
          %s428 = smul.addr %s427, 16
          %s429 = scalar_lea.hbm %s2, %s428
          %s431 = sshll.u32 %s406, 4
          %s432 = int_to_ptr.vmem [resolvable:$true] %s431
          %434 = dma.vmem_to_hbm [thread:$0]  %s432, 16, %s429, %s404
        $region36: #{tpu_custom_call.1} parent=23 // pred_fallthru
          _
      $region24: #{tpu_custom_call.1} parent=5 // pred_fallthru
        _
      %p435 = scmp.le.s32.totalorder 2, %s18
      // Predicated region
      $region37: #{tpu_custom_call.1} parent=5 // pred_check
        %p436 = pneg %p435
      $region38: #{tpu_custom_call.1} parent=5 // pred_check_branch
        %438 = sbr.rel (%p436) target = $region40
      $region39: #{tpu_custom_call.1} parent=5 // pred_region
        %s439 = ssub.s32 %s18, 2
        // Predicated region
        $region41: #{tpu_custom_call.1} parent=39 // pred_check
          %p440 = pneg %p89
        $region42: #{tpu_custom_call.1} parent=39 // pred_check_branch
          %442 = sbr.rel (%p440) target = $region44
        $region43: #{tpu_custom_call.1} parent=39 // pred_region
          %s443 = sand.u32 %s74, 1
          %s444 = scalar_lea.sflag [#allocation4], %s443
          %s445 = sand.u32 %s74, 1
          %s446 = scalar_lea.vmem [#allocation5], %s445
          %447 = dma.done %s444, 16
        $region44: #{tpu_custom_call.1} parent=39 // pred_fallthru
          _
        // Predicated region
        $region45: #{tpu_custom_call.1} parent=39 // pred_check
          %p448 = pneg %p117
        $region46: #{tpu_custom_call.1} parent=39 // pred_check_branch
          %450 = sbr.rel (%p448) target = $region48
        $region47: #{tpu_custom_call.1} parent=39 // pred_region
          %s451 = sand.u32 %s102, 1
          %s452 = scalar_lea.sflag [#allocation7], %s451
          %s453 = sand.u32 %s102, 1
          %s454 = scalar_lea.vmem [#allocation6], %s453
          %455 = dma.done %s452, 16
        $region48: #{tpu_custom_call.1} parent=39 // pred_fallthru
          _
      $region40: #{tpu_custom_call.1} parent=5 // pred_fallthru
        _
    $region6: #{tpu_custom_call.1} parent=1 // loop_footer
      %s22 = sadd.s32 1, %s18
    $region7: #{tpu_custom_call.1} parent=1 // loop_footer_branch
      %17 = sbr.rel target = $region3
    $region8: #{tpu_custom_call.1} parent=1 // loop_exit
      _
    %456 = vsyncpa [#allocation3], 1
    %s457 = scalar_lea.sflag [#allocation3], 1
    %458 = vsyncpa %s457, 1
    %459 = vsyncpa [#allocation4], 1
    %s460 = scalar_lea.sflag [#allocation4], 1
    %461 = vsyncpa %s460, 1
    %462 = vsyncpa [#allocation7], 1
    %s463 = scalar_lea.sflag [#allocation7], 1
    %464 = vsyncpa %s463, 1

</llo_original>
